<compile_context>
chip_gen: v7x
topology: tpu7x:2x2x1
jax: 0.10.0
libtpu: 0.0.40
codegen_flags: <defaults>
</compile_context>

<pallas_src>
import jax
import jax.numpy as jnp
from jax.experimental import pallas as pl
from jax.experimental.pallas import tpu as pltpu


def _attention4_kernel(z_ref, w1_ref, b1_ref, w2_ref, out_ref, beta_ref):
    # z_ref:    (TB, S, D)   TB batch elements per grid step
    # w1_ref:   (D, H)       first Linear weight, (in, hidden) layout (= weight.T)
    # b1_ref:   (1, H)       first Linear bias
    # w2_ref:   (1, H)       second Linear weight as a row (native PyTorch layout)
    # out_ref:  (TB, S, D)   beta * z
    # beta_ref: (TB, S, 1)   softmax weights (column layout, matches z sublanes)
    tb, s, d = z_ref.shape

    z = z_ref[...]                                     # native dtype, no f32 copy
    z2d = z.reshape(tb * s, d)                         # fold batch -> tall M (free reshape)

    # Linear -> Tanh  (MXU matmul with M = TB*S, f32 accumulation; operands stay
    # in z's dtype -- bf16 inputs hit the bf16 MXU path, f32 inputs stay exact).
    # TODO(synk): on v6e/v7x a bf16 tanh roughly doubles EUP throughput; kept in
    # f32 here to preserve 1e-5 parity with the PyTorch reference.
    h = jnp.tanh(
        jnp.dot(z2d, w1_ref[...], preferred_element_type=jnp.float32)
        + b1_ref[...].astype(jnp.float32)
    )                                                  # (TB*S, H) f32

    # Linear(H -> 1, no bias) as a VPU multiply + lane reduction, keeping the
    # result in "column" layout (one scalar per (b, s) row -> no relayout).
    logits = jnp.sum(h * w2_ref[...].astype(jnp.float32),
                     axis=-1, keepdims=True)           # (TB*S, 1)
    logits = logits.reshape(tb, s, 1)                  # leading-dim split only

    # softmax over the sequence axis (dim=1 of the PyTorch (B, S, 1) tensor),
    # independently per batch element; f32 throughout.
    m = jnp.max(logits, axis=1, keepdims=True)         # (TB, 1, 1)
    e = jnp.exp(logits - m)                            # (TB, S, 1)
    denom = jnp.sum(e, axis=1, keepdims=True)          # (TB, 1, 1)
    beta = e * pl.reciprocal(denom, approx=False)      # (TB, S, 1)

    beta_ref[...] = beta.astype(beta_ref.dtype)
    # beta is a per-(b,s) scalar broadcast across the lane (feature) axis.
    out_ref[...] = (z * beta.astype(z.dtype)).astype(out_ref.dtype)


def _tpu_generation_info():
    """Best-effort (vmem_bytes, tensorcores_per_chip). Conservative fallbacks."""
    vmem_bytes = 64 * 1024 * 1024       # conservative default (v7x-sized)
    cores = 1
    try:
        info = pltpu.get_tpu_info()
        v = getattr(info, "vmem_capacity_bytes", None)
        if v:
            vmem_bytes = int(v)
        for attr in ("num_cores", "num_tensorcores", "tensorcore_count"):
            c = getattr(info, attr, None)
            if c:
                cores = max(cores, int(c))
                break
    except Exception:
        pass
    try:
        kind = jax.devices()[0].device_kind.lower()
        if "v7" in kind:
            cores = max(cores, 2)       # v7x: 2 TensorCores per chip
        elif any(g in kind for g in ("v5 lite", "v5e", "v6", "trillium")):
            vmem_bytes = max(vmem_bytes, 128 * 1024 * 1024)
    except Exception:
        pass
    return vmem_bytes, cores


def _pick_tb(B, S, D, H, itemsize, vmem_bytes, cores):
    """Pick the per-step batch tile TB and a matching vmem_limit_bytes.

    VMEM accounting per batch element (per grid step):
      * z tile + out tile, each double-buffered by the BlockSpec pipeline (2x)
      * beta tile, double-buffered (negligible)
      * f32 intermediates: tanh activation h (S*H), the beta*z product (S*D),
        and a handful of small (S,1) vectors.
    Resident weight blocks (double-buffered) are charged once.
    """
    io_per_b = 2 * 2 * S * D * itemsize            # z + out, double-buffered
    beta_per_b = 2 * 2 * S * itemsize
    interm_per_b = S * H * 4 + S * D * 4 + 8 * S * 4
    per_b = io_per_b + beta_per_b + interm_per_b
    weights = 2 * (D * H + 2 * H) * 4              # w1 + b1 + w2, double-buffered

    # Budget: leave headroom under physical VMEM for Mosaic scratch/regalloc.
    budget = int(vmem_bytes * 0.625) - weights     # ~40 MiB on v7x, ~80 MiB on v5e/v6e

    divisors = [tb for tb in range(1, B + 1) if B % tb == 0]
    fitting = [tb for tb in divisors if tb * per_b <= budget]

    if not fitting:
        # TODO(synk): split along S with an online softmax for shapes where even
        # TB=1 exceeds the budget; for now take the smallest tile and size the
        # VMEM limit from its real footprint.
        tb = 1
    elif cores >= 2:
        # Multi-TC chip: prefer a step count that's an even multiple of the core
        # count so both TensorCores get equal work; else any multi-step split;
        # else the largest fitting tile.
        even = [t for t in fitting if (B // t) % cores == 0]
        multi = [t for t in fitting if B // t >= cores]
        tb = max(even) if even else (max(multi) if multi else max(fitting))
    else:
        # Single TC: the grid is a serial loop -- fewest steps wins
        # (grid=(1,) when the whole problem fits).
        tb = max(fitting)

    need = tb * per_b + weights
    vmem_limit = max(32 * 1024 * 1024,
                     min(2 * need + weights, (vmem_bytes * 3) // 4))
    return tb, vmem_limit


def attention4(z, w1, b1, w2):
    """
    z  : (B, S, D)  float32 / bfloat16
    w1 : (D, H)     first Linear weight, laid out as (in, hidden) (= weight.T)
    b1 : (1, H)     first Linear bias
    w2 : (1, H)     second Linear weight (native nn.Linear(H, 1) layout)
    returns (beta * z, beta) with shapes (B, S, D) and (B, S, 1)
    """
    B, S, D = z.shape
    H = w1.shape[1]
    itemsize = jnp.dtype(z.dtype).itemsize

    vmem_bytes, cores = _tpu_generation_info()
    TB, vmem_limit = _pick_tb(B, S, D, H, itemsize, vmem_bytes, cores)
    grid = (B // TB,)

    # Feed the MXU operands in z's dtype (bf16 in, bf16 matmul; f32 in, exact f32).
    w1 = w1.astype(z.dtype)

    grid_spec = pltpu.PrefetchScalarGridSpec(
        num_scalar_prefetch=0,
        grid=grid,
        in_specs=[
            pl.BlockSpec((TB, S, D), lambda b: (b, 0, 0)),  # z: TB batch elements
            pl.BlockSpec((D, H), lambda b: (0, 0)),         # w1: resident (constant block)
            pl.BlockSpec((1, H), lambda b: (0, 0)),         # b1: resident
            pl.BlockSpec((1, H), lambda b: (0, 0)),         # w2: resident
        ],
        out_specs=[
            pl.BlockSpec((TB, S, D), lambda b: (b, 0, 0)),  # beta * z (dominant output)
            pl.BlockSpec((TB, S, 1), lambda b: (b, 0, 0)),  # beta (column layout)
        ],
    )

    cost = pl.CostEstimate(
        flops=2 * B * S * D * H + 2 * B * S * H + 2 * B * S * D,
        transcendentals=B * S * H + B * S,                  # tanh + exp
        bytes_accessed=(2 * B * S * D + B * S) * itemsize
        + (D * H + 2 * H) * jnp.dtype(w1.dtype).itemsize,
    )

    out, beta = pl.pallas_call(
        _attention4_kernel,
        out_shape=(
            jax.ShapeDtypeStruct((B, S, D), z.dtype),
            jax.ShapeDtypeStruct((B, S, 1), z.dtype),
        ),
        grid_spec=grid_spec,
        compiler_params=pltpu.CompilerParams(
            dimension_semantics=("parallel",),
            vmem_limit_bytes=int(vmem_limit),
        ),
        cost_estimate=cost,
    )(z, w1, b1, w2)

    return out, beta


def attention4_ref(z, w1, b1, w2):
    """Pure-JAX reference matching the PyTorch module semantics."""
    w = jnp.tanh(jnp.einsum("bsd,dh->bsh", z, w1) + b1) @ w2.reshape(-1, 1)
    beta = jax.nn.softmax(w, axis=1)     # softmax over the sequence axis
    return beta * z, beta


if __name__ == "__main__":
    key = jax.random.PRNGKey(0)
    B, S, D, H = 16, 8, 32, 128  # batch, seq, in_size, hidden_size

    k_z, k_w1, k_b1, k_w2 = jax.random.split(key, 4)
    z = jax.random.normal(k_z, (B, S, D), dtype=jnp.float32)
    # Deterministic synthetic parameters (PyTorch-like uniform init ranges).
    bound1 = 1.0 / jnp.sqrt(jnp.float32(D))
    bound2 = 1.0 / jnp.sqrt(jnp.float32(H))
    w1 = jax.random.uniform(k_w1, (D, H), minval=-bound1, maxval=bound1,
                            dtype=jnp.float32)
    b1 = jax.random.uniform(k_b1, (1, H), minval=-bound1, maxval=bound1,
                            dtype=jnp.float32)
    w2 = jax.random.uniform(k_w2, (1, H), minval=-bound2, maxval=bound2,
                            dtype=jnp.float32)

    out, beta = attention4(z, w1, b1, w2)
    jax.block_until_ready((out, beta))

    out_ref, beta_ref = attention4_ref(z, w1, b1, w2)
    assert out.shape == (B, S, D) and beta.shape == (B, S, 1)
    assert jnp.allclose(out, out_ref, atol=1e-5, rtol=1e-5)
    assert jnp.allclose(beta, beta_ref, atol=1e-5, rtol=1e-5)
    # softmax over the sequence axis sums to 1 per batch element
    assert jnp.allclose(jnp.sum(beta, axis=1), 1.0, atol=1e-5)

    print("KERNEL_OK")
</pallas_src>

<mosaic_0001>
module attributes {stable_mosaic.version = 11 : i64} {
  func.func @_attention4_kernel(%arg0: i32, %arg1: memref<16x8x32xf32, #tpu.memory_space<vmem>>, %arg2: memref<32x128xf32, #tpu.memory_space<vmem>>, %arg3: memref<1x128xf32, #tpu.memory_space<vmem>>, %arg4: memref<1x128xf32, #tpu.memory_space<vmem>>, %arg5: memref<16x8x32xf32, #tpu.memory_space<vmem>>, %arg6: memref<16x8x1xf32, #tpu.memory_space<vmem>>) attributes {dimension_semantics = [#tpu.dimension_semantics<parallel>], iteration_bounds = array<i64: 1>, scalar_prefetch = 0 : i64, scratch_operands = 0 : i64, tpu.core_type = #tpu.core_type<tc>, window_params = [{transform_indices = @transform_0, window_bounds = array<i64: 16, 8, 32>}, {pipeline_mode = #tpu.pipeline_mode<synchronous>, transform_indices = @transform_1, window_bounds = array<i64: 32, 128>}, {pipeline_mode = #tpu.pipeline_mode<synchronous>, transform_indices = @transform_2, window_bounds = array<i64: 1, 128>}, {pipeline_mode = #tpu.pipeline_mode<synchronous>, transform_indices = @transform_3, window_bounds = array<i64: 1, 128>}, {transform_indices = @transform_4, window_bounds = array<i64: 16, 8, 32>}, {transform_indices = @transform_5, window_bounds = array<i64: 16, 8, 1>}]} {
    %c0 = arith.constant 0 : index
    %c0_0 = arith.constant 0 : index
    %c0_1 = arith.constant 0 : index
    %0 = vector.load %arg1[%c0, %c0_0, %c0_1] : memref<16x8x32xf32, #tpu.memory_space<vmem>>, vector<16x8x32xf32>
    %1 = vector.shape_cast %0 : vector<16x8x32xf32> to vector<128x32xf32>
    %c0_2 = arith.constant 0 : index
    %c0_3 = arith.constant 0 : index
    %2 = vector.load %arg2[%c0_2, %c0_3] : memref<32x128xf32, #tpu.memory_space<vmem>>, vector<32x128xf32>
    %cst = arith.constant dense<0.000000e+00> : vector<128x128xf32>
    %3 = tpu.matmul %1, %2, %cst {dimension_numbers = #tpu.dot_dimension_numbers<[1], [0], [0], [1], [0, 0, 1, 1], [], []>} : vector<128x32xf32>, vector<32x128xf32>, vector<128x128xf32> -> vector<128x128xf32>
    %c0_4 = arith.constant 0 : index
    %c0_5 = arith.constant 0 : index
    %4 = vector.load %arg3[%c0_4, %c0_5] : memref<1x128xf32, #tpu.memory_space<vmem>>, vector<1x128xf32>
    %5 = vector.broadcast %4 : vector<1x128xf32> to vector<128x128xf32>
    %6 = arith.addf %3, %5 : vector<128x128xf32>
    %7 = math.tanh %6 : vector<128x128xf32>
    %c0_6 = arith.constant 0 : index
    %c0_7 = arith.constant 0 : index
    %8 = vector.load %arg4[%c0_6, %c0_7] : memref<1x128xf32, #tpu.memory_space<vmem>>, vector<1x128xf32>
    %9 = vector.broadcast %8 : vector<1x128xf32> to vector<128x128xf32>
    %10 = arith.mulf %7, %9 : vector<128x128xf32>
    %cst_8 = arith.constant dense<0.000000e+00> : vector<128xf32>
    %11 = vector.multi_reduction <add>, %10, %cst_8 [1] : vector<128x128xf32> to vector<128xf32>
    %12 = vector.shape_cast %11 : vector<128xf32> to vector<128x1xf32>
    %13 = vector.shape_cast %12 : vector<128x1xf32> to vector<16x8x1xf32>
    %cst_9 = arith.constant dense<0xFF800000> : vector<16x1xf32>
    %14 = vector.multi_reduction <maximumf>, %13, %cst_9 [1] : vector<16x8x1xf32> to vector<16x1xf32>
    %15 = vector.shape_cast %14 : vector<16x1xf32> to vector<16x1x1xf32>
    %16 = vector.broadcast %15 : vector<16x1x1xf32> to vector<16x8x1xf32>
    %17 = arith.subf %13, %16 : vector<16x8x1xf32>
    %18 = math.exp %17 : vector<16x8x1xf32>
    %cst_10 = arith.constant dense<0.000000e+00> : vector<16x1xf32>
    %19 = vector.multi_reduction <add>, %18, %cst_10 [1] : vector<16x8x1xf32> to vector<16x1xf32>
    %20 = vector.shape_cast %19 : vector<16x1xf32> to vector<16x1x1xf32>
    %21 = tpu.reciprocal %20 : vector<16x1x1xf32> -> vector<16x1x1xf32>
    %22 = vector.broadcast %21 : vector<16x1x1xf32> to vector<16x8x1xf32>
    %23 = arith.mulf %18, %22 : vector<16x8x1xf32>
    %c0_11 = arith.constant 0 : index
    %c0_12 = arith.constant 0 : index
    %c0_13 = arith.constant 0 : index
    %24 = vector.load %arg6[%c0_11, %c0_12, %c0_13] : memref<16x8x1xf32, #tpu.memory_space<vmem>>, vector<16x8x1xf32>
    tpu.vector_store %arg6[%c0_11, %c0_12, %c0_13], %23 {strides = array<i32>} : memref<16x8x1xf32, #tpu.memory_space<vmem>>, vector<16x8x1xf32>,
    %25 = vector.broadcast %23 : vector<16x8x1xf32> to vector<16x8x32xf32>
    %26 = arith.mulf %0, %25 : vector<16x8x32xf32>
    %c0_14 = arith.constant 0 : index
    %c0_15 = arith.constant 0 : index
    %c0_16 = arith.constant 0 : index
    %27 = vector.load %arg5[%c0_14, %c0_15, %c0_16] : memref<16x8x32xf32, #tpu.memory_space<vmem>>, vector<16x8x32xf32>
    tpu.vector_store %arg5[%c0_14, %c0_15, %c0_16], %26 {strides = array<i32>} : memref<16x8x32xf32, #tpu.memory_space<vmem>>, vector<16x8x32xf32>,
    return
  }
  func.func @transform_0(%arg0: i32) -> (i32, i32, i32) {
    %c0_i32 = arith.constant 0 : i32
    %c0_i32_0 = arith.constant 0 : i32
    %c0_i32_1 = arith.constant 0 : i32
    return %arg0, %c0_i32, %c0_i32_0 : i32, i32, i32
  }
  func.func @transform_1(%arg0: i32) -> (i32, i32) {
    %c0_i32 = arith.constant 0 : i32
    %c0_i32_0 = arith.constant 0 : i32
    %c0_i32_1 = arith.constant 0 : i32
    return %c0_i32, %c0_i32_0 : i32, i32
  }
  func.func @transform_2(%arg0: i32) -> (i32, i32) {
    %c0_i32 = arith.constant 0 : i32
    %c0_i32_0 = arith.constant 0 : i32
    %c0_i32_1 = arith.constant 0 : i32
    return %c0_i32, %c0_i32_0 : i32, i32
  }
  func.func @transform_3(%arg0: i32) -> (i32, i32) {
    %c0_i32 = arith.constant 0 : i32
    %c0_i32_0 = arith.constant 0 : i32
    %c0_i32_1 = arith.constant 0 : i32
    return %c0_i32, %c0_i32_0 : i32, i32
  }
  func.func @transform_4(%arg0: i32) -> (i32, i32, i32) {
    %c0_i32 = arith.constant 0 : i32
    %c0_i32_0 = arith.constant 0 : i32
    %c0_i32_1 = arith.constant 0 : i32
    return %arg0, %c0_i32, %c0_i32_0 : i32, i32, i32
  }
  func.func @transform_5(%arg0: i32) -> (i32, i32, i32) {
    %c0_i32 = arith.constant 0 : i32
    %c0_i32_0 = arith.constant 0 : i32
    %c0_i32_1 = arith.constant 0 : i32
    return %arg0, %c0_i32, %c0_i32_0 : i32, i32, i32
  }
}

</mosaic_0001>

<llo_original>
// kernel: tpu_custom_call.1
$region0: #{tpu_custom_call.1}
  #allocation0 [shape = 'u32[]', space=smem, size = 0x4, offset = 0x4, fixed_abs, tag = 'smem constant byte address 0x4 - core index']
  #allocation1 [shape = 'u32[144,128]{1,0:T(1,128)}', space=vmem, size = 0x12000, scoped, tag = 'internal scratch']
  %s0 = inlined_call_operand.hbm [shape: f32[16,8,32], index: 0, kind: input, shape index: {}]
  %s1 = inlined_call_operand.hbm [shape: f32[32,128], index: 1, kind: input, shape index: {}]
  %s2 = inlined_call_operand.vmem [shape: f32[1,128], index: 2, kind: input, shape index: {}]
  %s3 = inlined_call_operand.vmem [shape: f32[1,128], index: 3, kind: input, shape index: {}]
  %s4 = inlined_call_operand.hbm [shape: f32[16,8,32], index: 4, kind: output, shape index: {0}]
  %s5 = inlined_call_operand.vmem [shape: f32[16,8,1], index: 5, kind: output, shape index: {1}]
  %6 = xla_tuple %s4, %s5
  %s7 = sld [smem:[#allocation0]]
  $region42: #{tpu_custom_call.1} parent=0
    _
  %s9 = ssub.s32 1, %s7
  %s10 = scalar_select 0, %s9, %s7
  $region1: #{tpu_custom_call.1} parent=0
    #allocation2 [shape = 'u8[65536]{0}', space=vmem, size = 0x10000, scoped, tag = 'input window, operand 0, single buffered']
    #allocation3 [shape = 's32[1]{0}', space=sflag, size = 0x4, scoped, tag = 'scoped memory for tpu_custom_call.1']
    #allocation4 [shape = 's32[1]{0}', space=sflag, size = 0x4, scoped, tag = 'scoped memory for tpu_custom_call.1']
    #allocation5 [shape = 'u8[16384]{0}', space=vmem, size = 0x4000, scoped, tag = 'input window, operand 1, single buffered']
    #allocation6 [shape = 's32[1]{0}', space=sflag, size = 0x4, scoped, tag = 'scoped memory for tpu_custom_call.1']
    #allocation7 [shape = 'u8[65536]{0}', space=vmem, size = 0x10000, scoped, tag = 'output window, operand 0, single buffered']
    %11 = vsyncpa [#allocation3], 0
    %12 = vsyncpa [#allocation6], 0
    %13 = vsyncpa [#allocation4], 0
    // Predicated region
    $region2: #{tpu_custom_call.1} parent=1 // pred_check
      _
    $region3: #{tpu_custom_call.1} parent=1 // pred_check_branch
      %15 = sbr.rel (0) target = $region5
    $region4: #{tpu_custom_call.1} parent=1 // pred_region
      %s17 = ssub.s32 2048, 2048
      %18 = vsyncadd [#allocation3], %s17
      %s19 = sshll.u32 [#allocation2], 4
      %s20 = int_to_ptr.vmem [resolvable:$true] %s19
      %25 = dma.hbm_to_vmem [thread:$0]  %s0, 2048, %s20, [#allocation3], 128, 128, 8
    $region5: #{tpu_custom_call.1} parent=1 // pred_fallthru
      _
    // Predicated region
    $region6: #{tpu_custom_call.1} parent=1 // pred_check
      _
    $region7: #{tpu_custom_call.1} parent=1 // pred_check_branch
      %27 = sbr.rel (0) target = $region9
    $region8: #{tpu_custom_call.1} parent=1 // pred_region
      %s29 = ssub.s32 512, 512
      %30 = vsyncadd [#allocation6], %s29
      %s31 = sshll.u32 [#allocation5], 4
      %s32 = int_to_ptr.vmem [resolvable:$true] %s31
      %37 = dma.hbm_to_vmem [thread:$0]  %s1, 512, %s32, [#allocation6], 128, 128, 8
    $region9: #{tpu_custom_call.1} parent=1 // pred_fallthru
      _
    // Predicated region
    $region10: #{tpu_custom_call.1} parent=1 // pred_check
      _
    $region11: #{tpu_custom_call.1} parent=1 // pred_check_branch
      %39 = sbr.rel (0) target = $region13
    $region12: #{tpu_custom_call.1} parent=1 // pred_region
      _
    $region13: #{tpu_custom_call.1} parent=1 // pred_fallthru
      _
    // Predicated region
    $region14: #{tpu_custom_call.1} parent=1 // pred_check
      _
    $region15: #{tpu_custom_call.1} parent=1 // pred_check_branch
      %41 = sbr.rel (0) target = $region17
    $region16: #{tpu_custom_call.1} parent=1 // pred_region
      _
    $region17: #{tpu_custom_call.1} parent=1 // pred_fallthru
      _
    // Predicated region
    $region18: #{tpu_custom_call.1} parent=1 // pred_check
      _
    $region19: #{tpu_custom_call.1} parent=1 // pred_check_branch
      %43 = sbr.rel (0) target = $region21
    $region20: #{tpu_custom_call.1} parent=1 // pred_region
      %44 = dma.done [#allocation3], 2048
    $region21: #{tpu_custom_call.1} parent=1 // pred_fallthru
      _
    // Predicated region
    $region22: #{tpu_custom_call.1} parent=1 // pred_check
      _
    $region23: #{tpu_custom_call.1} parent=1 // pred_check_branch
      %46 = sbr.rel (0) target = $region25
    $region24: #{tpu_custom_call.1} parent=1 // pred_region
      %47 = dma.done [#allocation6], 512
    $region25: #{tpu_custom_call.1} parent=1 // pred_fallthru
      _
    %v48 = vld [vmem:[#allocation2] sm:$0xff]
    %v49 = vld [vmem:[#allocation2 + $0x8] sm:$0xff]
    %v50 = vld [vmem:[#allocation2 + $0x10] sm:$0xff]
    %v51 = vld [vmem:[#allocation2 + $0x18] sm:$0xff]
    %v52 = vld [vmem:[#allocation2 + $0x20] sm:$0xff]
    %v53 = vld [vmem:[#allocation2 + $0x28] sm:$0xff]
    %v54 = vld [vmem:[#allocation2 + $0x30] sm:$0xff]
    %v55 = vld [vmem:[#allocation2 + $0x38] sm:$0xff]
    %v56 = vld [vmem:[#allocation2 + $0x40] sm:$0xff]
    %v57 = vld [vmem:[#allocation2 + $0x48] sm:$0xff]
    %v58 = vld [vmem:[#allocation2 + $0x50] sm:$0xff]
    %v59 = vld [vmem:[#allocation2 + $0x58] sm:$0xff]
    %v60 = vld [vmem:[#allocation2 + $0x60] sm:$0xff]
    %v61 = vld [vmem:[#allocation2 + $0x68] sm:$0xff]
    %v62 = vld [vmem:[#allocation2 + $0x70] sm:$0xff]
    %v63 = vld [vmem:[#allocation2 + $0x78] sm:$0xff]
    %v64 = vld [vmem:[#allocation5] sm:$0xff]
    %v65 = vld [vmem:[#allocation5 + $0x8] sm:$0xff]
    %v66 = vld [vmem:[#allocation5 + $0x10] sm:$0xff]
    %v67 = vld [vmem:[#allocation5 + $0x18] sm:$0xff]
    %v68 = vld [vmem:[%s2] sm:$0x1]
    %v70 = vlaneseq
    %v71 = vshrl.u32 %v70, 7
    %v72 = vsub.s32 0, %v71
    %v73 = vrot.slane %v68, %v72
    %vm75 = vcmask 261120
    %v77 = vsel %vm75, %v48, 0
    %v80 = vsel %vm75, %v49, 0
    %v83 = vsel %vm75, %v50, 0
    %v86 = vsel %vm75, %v51, 0
    %v89 = vsel %vm75, %v52, 0
    %v92 = vsel %vm75, %v53, 0
    %v95 = vsel %vm75, %v54, 0
    %v98 = vsel %vm75, %v55, 0
    %v101 = vsel %vm75, %v56, 0
    %v104 = vsel %vm75, %v57, 0
    %v107 = vsel %vm75, %v58, 0
    %v110 = vsel %vm75, %v59, 0
    %v113 = vsel %vm75, %v60, 0
    %v116 = vsel %vm75, %v61, 0
    %v119 = vsel %vm75, %v62, 0
    %v122 = vsel %vm75, %v63, 0
    %124 = vmatprep.subr.mxu0 0.0
    %125 = vmatpush1.msra.mxu0 %v64
    %126 = vmatprep.subr.mxu0 0.0
    %127 = vmatpush1.msra.mxu0 %v65
    %128 = vmatprep.subr.mxu0 0.0
    %129 = vmatpush1.msra.mxu0 %v66
    %130 = vmatprep.subr.mxu0 0.0
    %131 = vmatpush1.msra.mxu0 %v67
    %132 = vmatprep.subr.mxu0 0.0
    %133 = vmatpush1.msra.mxu0 0.0
    %134 = vmatprep.subr.mxu0 0.0
    %135 = vmatpush1.msra.mxu0 0.0
    %136 = vmatprep.subr.mxu0 0.0
    %137 = vmatpush1.msra.mxu0 0.0
    %138 = vmatprep.subr.mxu0 0.0
    %139 = vmatpush1.msra.mxu0 0.0
    %140 = vmatprep.subr.mxu0 0.0
    %141 = vmatpush1.msra.mxu0 0.0
    %142 = vmatprep.subr.mxu0 0.0
    %143 = vmatpush1.msra.mxu0 0.0
    %144 = vmatprep.subr.mxu0 0.0
    %145 = vmatpush1.msra.mxu0 0.0
    %146 = vmatprep.subr.mxu0 0.0
    %147 = vmatpush1.msra.mxu0 0.0
    %148 = vmatprep.subr.mxu0 0.0
    %149 = vmatpush1.msra.mxu0 0.0
    %150 = vmatprep.subr.mxu0 0.0
    %151 = vmatpush1.msra.mxu0 0.0
    %152 = vmatprep.subr.mxu0 0.0
    %153 = vmatpush1.msra.mxu0 0.0
    %154 = vmatprep.subr.mxu0 0.0
    %155 = vmatpush1.msra.mxu0 0.0
    %156 = vmatprep.subr.mxu0 0.0
    %157 = vmatpush1.msra.mxu0 0.0
    %158 = vmatprep.subr.mxu0 0.0
    %159 = vmatpush1.msra.mxu0 0.0
    %160 = vmatprep.subr.mxu0 0.0
    %161 = vmatpush1.msra.mxu0 0.0
    %162 = vmatprep.subr.mxu0 0.0
    %163 = vmatpush1.msra.mxu0 0.0
    %164 = vmatprep.subr.mxu0 0.0
    %165 = vmatpush1.msra.mxu0 0.0
    %166 = vmatprep.subr.mxu0 0.0
    %167 = vmatpush1.msra.mxu0 0.0
    %168 = vmatprep.subr.mxu0 0.0
    %169 = vmatpush1.msra.mxu0 0.0
    %170 = vmatprep.subr.mxu0 0.0
    %171 = vmatpush1.msra.mxu0 0.0
    %172 = vmatprep.subr.mxu0 0.0
    %173 = vmatpush1.msra.mxu0 0.0
    %174 = vmatprep.subr.mxu0 0.0
    %175 = vmatpush1.msra.mxu0 0.0
    %176 = vmatprep.subr.mxu0 0.0
    %177 = vmatpush1.msra.mxu0 0.0
    %178 = vmatprep.subr.mxu0 0.0
    %179 = vmatpush1.msra.mxu0 0.0
    %180 = vmatprep.subr.mxu0 0.0
    %181 = vmatpush1.msra.mxu0 0.0
    %182 = vmatprep.subr.mxu0 0.0
    %183 = vmatpush1.msra.mxu0 0.0
    %184 = vmatprep.subr.mxu0 0.0
    %185 = vmatpush1.msra.mxu0 0.0
    %186 = vmatprep.subr.mxu0 0.0
    %187 = vmatpush1.msra.mxu0 0.0
    %188 = vmatprep.mubr.f32.mxu0 0.0
    %189 = vmatmul.mubr.f32.gmra.mrb[0].mxu0 %v77
    %v190 = vpop.f32.mrb[0].mxu0
    %v191 = vadd.f32 %v73, %v190
    %v192 = vpop.f32.mrb[0].mxu0
    %193 = vmatprep.mubr.f32.mxu0 0.0
    %194 = vmatmul.mubr.f32.gmra.mrb[0].mxu0 %v80
    %v195 = vpop.f32.mrb[0].mxu0
    %v196 = vadd.f32 %v73, %v195
    %v197 = vpop.f32.mrb[0].mxu0
    %198 = vmatprep.mubr.f32.mxu0 0.0
    %199 = vmatmul.mubr.f32.gmra.mrb[0].mxu0 %v83
    %v200 = vpop.f32.mrb[0].mxu0
    %v201 = vadd.f32 %v73, %v200
    %v202 = vpop.f32.mrb[0].mxu0
    %203 = vmatprep.mubr.f32.mxu0 0.0
    %204 = vmatmul.mubr.f32.gmra.mrb[0].mxu0 %v86
    %v205 = vpop.f32.mrb[0].mxu0
    %v206 = vadd.f32 %v73, %v205
    %v207 = vpop.f32.mrb[0].mxu0
    %208 = vmatprep.mubr.f32.mxu0 0.0
    %209 = vmatmul.mubr.f32.gmra.mrb[0].mxu0 %v89
    %v210 = vpop.f32.mrb[0].mxu0
    %v211 = vadd.f32 %v73, %v210
    %v212 = vpop.f32.mrb[0].mxu0
    %213 = vmatprep.mubr.f32.mxu0 0.0
    %214 = vmatmul.mubr.f32.gmra.mrb[0].mxu0 %v92
    %v215 = vpop.f32.mrb[0].mxu0
    %v216 = vadd.f32 %v73, %v215
    %v217 = vpop.f32.mrb[0].mxu0
    %218 = vmatprep.mubr.f32.mxu0 0.0
    %219 = vmatmul.mubr.f32.gmra.mrb[0].mxu0 %v95
    %v220 = vpop.f32.mrb[0].mxu0
    %v221 = vadd.f32 %v73, %v220
    %v222 = vpop.f32.mrb[0].mxu0
    %223 = vmatprep.mubr.f32.mxu0 0.0
    %224 = vmatmul.mubr.f32.gmra.mrb[0].mxu0 %v98
    %v225 = vpop.f32.mrb[0].mxu0
    %v226 = vadd.f32 %v73, %v225
    %v227 = vpop.f32.mrb[0].mxu0
    %228 = vmatprep.mubr.f32.mxu0 0.0
    %229 = vmatmul.mubr.f32.gmra.mrb[0].mxu0 %v101
    %v230 = vpop.f32.mrb[0].mxu0
    %v231 = vadd.f32 %v73, %v230
    %v232 = vpop.f32.mrb[0].mxu0
    %233 = vmatprep.mubr.f32.mxu0 0.0
    %234 = vmatmul.mubr.f32.gmra.mrb[0].mxu0 %v104
    %v235 = vpop.f32.mrb[0].mxu0
    %v236 = vadd.f32 %v73, %v235
    %v237 = vpop.f32.mrb[0].mxu0
    %238 = vmatprep.mubr.f32.mxu0 0.0
    %239 = vmatmul.mubr.f32.gmra.mrb[0].mxu0 %v107
    %v240 = vpop.f32.mrb[0].mxu0
    %v241 = vadd.f32 %v73, %v240
    %v242 = vpop.f32.mrb[0].mxu0
    %243 = vmatprep.mubr.f32.mxu0 0.0
    %244 = vmatmul.mubr.f32.gmra.mrb[0].mxu0 %v110
    %v245 = vpop.f32.mrb[0].mxu0
    %v246 = vadd.f32 %v73, %v245
    %v247 = vpop.f32.mrb[0].mxu0
    %248 = vmatprep.mubr.f32.mxu0 0.0
    %249 = vmatmul.mubr.f32.gmra.mrb[0].mxu0 %v113
    %v250 = vpop.f32.mrb[0].mxu0
    %v251 = vadd.f32 %v73, %v250
    %v252 = vpop.f32.mrb[0].mxu0
    %253 = vmatprep.mubr.f32.mxu0 0.0
    %254 = vmatmul.mubr.f32.gmra.mrb[0].mxu0 %v116
    %v255 = vpop.f32.mrb[0].mxu0
    %v256 = vadd.f32 %v73, %v255
    %v257 = vpop.f32.mrb[0].mxu0
    %258 = vmatprep.mubr.f32.mxu0 0.0
    %259 = vmatmul.mubr.f32.gmra.mrb[0].mxu0 %v119
    %v260 = vpop.f32.mrb[0].mxu0
    %v261 = vadd.f32 %v73, %v260
    %v262 = vpop.f32.mrb[0].mxu0
    %263 = vmatprep.mubr.f32.mxu0 0.0
    %264 = vmatmul.mubr.f32.gmra.mrb[0].mxu0 %v122
    %v265 = vpop.f32.mrb[0].mxu0
    %v266 = vadd.f32 %v73, %v265
    %v267 = vpop.f32.mrb[0].mxu0
    %268 = vdwg.mxu0
    %v269 = vtanh.pop %v191
    %v270 = vtanh.pop %v196
    %v271 = vtanh.pop %v201
    %v272 = vtanh.pop %v206
    %v273 = vtanh.pop %v211
    %v274 = vtanh.pop %v216
    %v275 = vtanh.pop %v221
    %v276 = vtanh.pop %v226
    %v277 = vtanh.pop %v231
    %v278 = vtanh.pop %v236
    %v279 = vtanh.pop %v241
    %v280 = vtanh.pop %v246
    %v281 = vtanh.pop %v251
    %v282 = vtanh.pop %v256
    %v283 = vtanh.pop %v261
    %v284 = vtanh.pop %v266
    %v285 = vld [vmem:[%s3] sm:$0x1]
    %v287 = vlaneseq
    %v288 = vshrl.u32 %v287, 7
    %v289 = vsub.s32 0, %v288
    %v290 = vrot.slane %v285, %v289
    %v292 = vmul.f32 %v269, %v290
    %v293 = vmul.f32 %v270, %v290
    %v294 = vmul.f32 %v271, %v290
    %v295 = vmul.f32 %v272, %v290
    %v296 = vmul.f32 %v273, %v290
    %v297 = vmul.f32 %v274, %v290
    %v298 = vmul.f32 %v275, %v290
    %v299 = vmul.f32 %v276, %v290
    %v300 = vmul.f32 %v277, %v290
    %v301 = vmul.f32 %v278, %v290
    %v302 = vmul.f32 %v279, %v290
    %v303 = vmul.f32 %v280, %v290
    %v304 = vmul.f32 %v281, %v290
    %v305 = vmul.f32 %v282, %v290
    %v306 = vmul.f32 %v283, %v290
    %v307 = vmul.f32 %v284, %v290
    %308 = vadd.xlane.f32.xlu0 %v292
    %v309 = vpop.xlane.xlu0 %308
    %310 = vadd.xlane.f32.xlu0 %v293
    %v311 = vpop.xlane.xlu0 %310
    %312 = vadd.xlane.f32.xlu0 %v294
    %v313 = vpop.xlane.xlu0 %312
    %314 = vadd.xlane.f32.xlu0 %v295
    %v315 = vpop.xlane.xlu0 %314
    %316 = vadd.xlane.f32.xlu0 %v296
    %v317 = vpop.xlane.xlu0 %316
    %318 = vadd.xlane.f32.xlu0 %v297
    %v319 = vpop.xlane.xlu0 %318
    %320 = vadd.xlane.f32.xlu0 %v298
    %v321 = vpop.xlane.xlu0 %320
    %322 = vadd.xlane.f32.xlu0 %v299
    %v323 = vpop.xlane.xlu0 %322
    %324 = vadd.xlane.f32.xlu0 %v300
    %v325 = vpop.xlane.xlu0 %324
    %326 = vadd.xlane.f32.xlu0 %v301
    %v327 = vpop.xlane.xlu0 %326
    %328 = vadd.xlane.f32.xlu0 %v302
    %v329 = vpop.xlane.xlu0 %328
    %330 = vadd.xlane.f32.xlu0 %v303
    %v331 = vpop.xlane.xlu0 %330
    %332 = vadd.xlane.f32.xlu0 %v304
    %v333 = vpop.xlane.xlu0 %332
    %334 = vadd.xlane.f32.xlu0 %v305
    %v335 = vpop.xlane.xlu0 %334
    %336 = vadd.xlane.f32.xlu0 %v306
    %v337 = vpop.xlane.xlu0 %336
    %338 = vadd.xlane.f32.xlu0 %v307
    %v339 = vpop.xlane.xlu0 %338
    %v340 = vrot.slane %v309, 4
    %v341 = vmax.f32 %v309, %v340
    %v342 = vrot.slane %v341, 2
    %v343 = vmax.f32 %v341, %v342
    %v344 = vrot.slane %v343, 1
    %v345 = vmax.f32 %v343, %v344
    %v346 = vrot.slane %v311, 4
    %v347 = vmax.f32 %v311, %v346
    %v348 = vrot.slane %v347, 2
    %v349 = vmax.f32 %v347, %v348
    %v350 = vrot.slane %v349, 1
    %v351 = vmax.f32 %v349, %v350
    %v352 = vrot.slane %v313, 4
    %v353 = vmax.f32 %v313, %v352
    %v354 = vrot.slane %v353, 2
    %v355 = vmax.f32 %v353, %v354
    %v356 = vrot.slane %v355, 1
    %v357 = vmax.f32 %v355, %v356
    %v358 = vrot.slane %v315, 4
    %v359 = vmax.f32 %v315, %v358
    %v360 = vrot.slane %v359, 2
    %v361 = vmax.f32 %v359, %v360
    %v362 = vrot.slane %v361, 1
    %v363 = vmax.f32 %v361, %v362
    %v364 = vrot.slane %v317, 4
    %v365 = vmax.f32 %v317, %v364
    %v366 = vrot.slane %v365, 2
    %v367 = vmax.f32 %v365, %v366
    %v368 = vrot.slane %v367, 1
    %v369 = vmax.f32 %v367, %v368
    %v370 = vrot.slane %v319, 4
    %v371 = vmax.f32 %v319, %v370
    %v372 = vrot.slane %v371, 2
    %v373 = vmax.f32 %v371, %v372
    %v374 = vrot.slane %v373, 1
    %v375 = vmax.f32 %v373, %v374
    %v376 = vrot.slane %v321, 4
    %v377 = vmax.f32 %v321, %v376
    %v378 = vrot.slane %v377, 2
    %v379 = vmax.f32 %v377, %v378
    %v380 = vrot.slane %v379, 1
    %v381 = vmax.f32 %v379, %v380
    %v382 = vrot.slane %v323, 4
    %v383 = vmax.f32 %v323, %v382
    %v384 = vrot.slane %v383, 2
    %v385 = vmax.f32 %v383, %v384
    %v386 = vrot.slane %v385, 1
    %v387 = vmax.f32 %v385, %v386
    %v388 = vrot.slane %v325, 4
    %v389 = vmax.f32 %v325, %v388
    %v390 = vrot.slane %v389, 2
    %v391 = vmax.f32 %v389, %v390
    %v392 = vrot.slane %v391, 1
    %v393 = vmax.f32 %v391, %v392
    %v394 = vrot.slane %v327, 4
    %v395 = vmax.f32 %v327, %v394
    %v396 = vrot.slane %v395, 2
    %v397 = vmax.f32 %v395, %v396
    %v398 = vrot.slane %v397, 1
    %v399 = vmax.f32 %v397, %v398
    %v400 = vrot.slane %v329, 4
    %v401 = vmax.f32 %v329, %v400
    %v402 = vrot.slane %v401, 2
    %v403 = vmax.f32 %v401, %v402
    %v404 = vrot.slane %v403, 1
    %v405 = vmax.f32 %v403, %v404
    %v406 = vrot.slane %v331, 4
    %v407 = vmax.f32 %v331, %v406
    %v408 = vrot.slane %v407, 2
    %v409 = vmax.f32 %v407, %v408
    %v410 = vrot.slane %v409, 1
    %v411 = vmax.f32 %v409, %v410
    %v412 = vrot.slane %v333, 4
    %v413 = vmax.f32 %v333, %v412
    %v414 = vrot.slane %v413, 2
    %v415 = vmax.f32 %v413, %v414
    %v416 = vrot.slane %v415, 1
    %v417 = vmax.f32 %v415, %v416
    %v418 = vrot.slane %v335, 4
    %v419 = vmax.f32 %v335, %v418
    %v420 = vrot.slane %v419, 2
    %v421 = vmax.f32 %v419, %v420
    %v422 = vrot.slane %v421, 1
    %v423 = vmax.f32 %v421, %v422
    %v424 = vrot.slane %v337, 4
    %v425 = vmax.f32 %v337, %v424
    %v426 = vrot.slane %v425, 2
    %v427 = vmax.f32 %v425, %v426
    %v428 = vrot.slane %v427, 1
    %v429 = vmax.f32 %v427, %v428
    %v430 = vrot.slane %v339, 4
    %v431 = vmax.f32 %v339, %v430
    %v432 = vrot.slane %v431, 2
    %v433 = vmax.f32 %v431, %v432
    %v434 = vrot.slane %v433, 1
    %v435 = vmax.f32 %v433, %v434
    %v436 = vsub.f32 %v309, %v345
    %v437 = vsub.f32 %v311, %v351
    %v438 = vsub.f32 %v313, %v357
    %v439 = vsub.f32 %v315, %v363
    %v440 = vsub.f32 %v317, %v369
    %v441 = vsub.f32 %v319, %v375
    %v442 = vsub.f32 %v321, %v381
    %v443 = vsub.f32 %v323, %v387
    %v444 = vsub.f32 %v325, %v393
    %v445 = vsub.f32 %v327, %v399
    %v446 = vsub.f32 %v329, %v405
    %v447 = vsub.f32 %v331, %v411
    %v448 = vsub.f32 %v333, %v417
    %v449 = vsub.f32 %v335, %v423
    %v450 = vsub.f32 %v337, %v429
    %v451 = vsub.f32 %v339, %v435
    %v452 = vmul.f32 %v436, 1.442695
    %v453 = vpow.pop %v452
    %v454 = vmul.f32 %v437, 1.442695
    %v455 = vpow.pop %v454
    %v456 = vmul.f32 %v438, 1.442695
    %v457 = vpow.pop %v456
    %v458 = vmul.f32 %v439, 1.442695
    %v459 = vpow.pop %v458
    %v460 = vmul.f32 %v440, 1.442695
    %v461 = vpow.pop %v460
    %v462 = vmul.f32 %v441, 1.442695
    %v463 = vpow.pop %v462
    %v464 = vmul.f32 %v442, 1.442695
    %v465 = vpow.pop %v464
    %v466 = vmul.f32 %v443, 1.442695
    %v467 = vpow.pop %v466
    %v468 = vmul.f32 %v444, 1.442695
    %v469 = vpow.pop %v468
    %v470 = vmul.f32 %v445, 1.442695
    %v471 = vpow.pop %v470
    %v472 = vmul.f32 %v446, 1.442695
    %v473 = vpow.pop %v472
    %v474 = vmul.f32 %v447, 1.442695
    %v475 = vpow.pop %v474
    %v476 = vmul.f32 %v448, 1.442695
    %v477 = vpow.pop %v476
    %v478 = vmul.f32 %v449, 1.442695
    %v479 = vpow.pop %v478
    %v480 = vmul.f32 %v450, 1.442695
    %v481 = vpow.pop %v480
    %v482 = vmul.f32 %v451, 1.442695
    %v483 = vpow.pop %v482
    %v484 = vrot.slane %v453, 4
    %v485 = vadd.f32 %v453, %v484
    %v486 = vrot.slane %v485, 2
    %v487 = vadd.f32 %v485, %v486
    %v488 = vrot.slane %v487, 1
    %v489 = vadd.f32 %v487, %v488
    %v490 = vrot.slane %v455, 4
    %v491 = vadd.f32 %v455, %v490
    %v492 = vrot.slane %v491, 2
    %v493 = vadd.f32 %v491, %v492
    %v494 = vrot.slane %v493, 1
    %v495 = vadd.f32 %v493, %v494
    %v496 = vrot.slane %v457, 4
    %v497 = vadd.f32 %v457, %v496
    %v498 = vrot.slane %v497, 2
    %v499 = vadd.f32 %v497, %v498
    %v500 = vrot.slane %v499, 1
    %v501 = vadd.f32 %v499, %v500
    %v502 = vrot.slane %v459, 4
    %v503 = vadd.f32 %v459, %v502
    %v504 = vrot.slane %v503, 2
    %v505 = vadd.f32 %v503, %v504
    %v506 = vrot.slane %v505, 1
    %v507 = vadd.f32 %v505, %v506
    %v508 = vrot.slane %v461, 4
    %v509 = vadd.f32 %v461, %v508
    %v510 = vrot.slane %v509, 2
    %v511 = vadd.f32 %v509, %v510
    %v512 = vrot.slane %v511, 1
    %v513 = vadd.f32 %v511, %v512
    %v514 = vrot.slane %v463, 4
    %v515 = vadd.f32 %v463, %v514
    %v516 = vrot.slane %v515, 2
    %v517 = vadd.f32 %v515, %v516
    %v518 = vrot.slane %v517, 1
    %v519 = vadd.f32 %v517, %v518
    %v520 = vrot.slane %v465, 4
    %v521 = vadd.f32 %v465, %v520
    %v522 = vrot.slane %v521, 2
    %v523 = vadd.f32 %v521, %v522
    %v524 = vrot.slane %v523, 1
    %v525 = vadd.f32 %v523, %v524
    %v526 = vrot.slane %v467, 4
    %v527 = vadd.f32 %v467, %v526
    %v528 = vrot.slane %v527, 2
    %v529 = vadd.f32 %v527, %v528
    %v530 = vrot.slane %v529, 1
    %v531 = vadd.f32 %v529, %v530
    %v532 = vrot.slane %v469, 4
    %v533 = vadd.f32 %v469, %v532
    %v534 = vrot.slane %v533, 2
    %v535 = vadd.f32 %v533, %v534
    %v536 = vrot.slane %v535, 1
    %v537 = vadd.f32 %v535, %v536
    %v538 = vrot.slane %v471, 4
    %v539 = vadd.f32 %v471, %v538
    %v540 = vrot.slane %v539, 2
    %v541 = vadd.f32 %v539, %v540
    %v542 = vrot.slane %v541, 1
    %v543 = vadd.f32 %v541, %v542
    %v544 = vrot.slane %v473, 4
    %v545 = vadd.f32 %v473, %v544
    %v546 = vrot.slane %v545, 2
    %v547 = vadd.f32 %v545, %v546
    %v548 = vrot.slane %v547, 1
    %v549 = vadd.f32 %v547, %v548
    %v550 = vrot.slane %v475, 4
    %v551 = vadd.f32 %v475, %v550
    %v552 = vrot.slane %v551, 2
    %v553 = vadd.f32 %v551, %v552
    %v554 = vrot.slane %v553, 1
    %v555 = vadd.f32 %v553, %v554
    %v556 = vrot.slane %v477, 4
    %v557 = vadd.f32 %v477, %v556
    %v558 = vrot.slane %v557, 2
    %v559 = vadd.f32 %v557, %v558
    %v560 = vrot.slane %v559, 1
    %v561 = vadd.f32 %v559, %v560
    %v562 = vrot.slane %v479, 4
    %v563 = vadd.f32 %v479, %v562
    %v564 = vrot.slane %v563, 2
    %v565 = vadd.f32 %v563, %v564
    %v566 = vrot.slane %v565, 1
    %v567 = vadd.f32 %v565, %v566
    %v568 = vrot.slane %v481, 4
    %v569 = vadd.f32 %v481, %v568
    %v570 = vrot.slane %v569, 2
    %v571 = vadd.f32 %v569, %v570
    %v572 = vrot.slane %v571, 1
    %v573 = vadd.f32 %v571, %v572
    %v574 = vrot.slane %v483, 4
    %v575 = vadd.f32 %v483, %v574
    %v576 = vrot.slane %v575, 2
    %v577 = vadd.f32 %v575, %v576
    %v578 = vrot.slane %v577, 1
    %v579 = vadd.f32 %v577, %v578
    %v580 = vrcp.pop %v489
    %v581 = vrcp.pop %v495
    %v582 = vrcp.pop %v501
    %v583 = vrcp.pop %v507
    %v584 = vrcp.pop %v513
    %v585 = vrcp.pop %v519
    %v586 = vrcp.pop %v525
    %v587 = vrcp.pop %v531
    %v588 = vrcp.pop %v537
    %v589 = vrcp.pop %v543
    %v590 = vrcp.pop %v549
    %v591 = vrcp.pop %v555
    %v592 = vrcp.pop %v561
    %v593 = vrcp.pop %v567
    %v594 = vrcp.pop %v573
    %v595 = vrcp.pop %v579
    %v596 = vmul.f32 %v453, %v580
    %v597 = vmul.f32 %v455, %v581
    %v598 = vmul.f32 %v457, %v582
    %v599 = vmul.f32 %v459, %v583
    %v600 = vmul.f32 %v461, %v584
    %v601 = vmul.f32 %v463, %v585
    %v602 = vmul.f32 %v465, %v586
    %v603 = vmul.f32 %v467, %v587
    %v604 = vmul.f32 %v469, %v588
    %v605 = vmul.f32 %v471, %v589
    %v606 = vmul.f32 %v473, %v590
    %v607 = vmul.f32 %v475, %v591
    %v608 = vmul.f32 %v477, %v592
    %v609 = vmul.f32 %v479, %v593
    %v610 = vmul.f32 %v481, %v594
    %v611 = vmul.f32 %v483, %v595
    %vm612 = vcmask 7168
    %613 = vst.msk [vmem:[%s5] sm:$0xff] %vm612, %v596
    %614 = vst.msk [vmem:[%s5 + $0x8] sm:$0xff] %vm612, %v597
    %615 = vst.msk [vmem:[%s5 + $0x10] sm:$0xff] %vm612, %v598
    %616 = vst.msk [vmem:[%s5 + $0x18] sm:$0xff] %vm612, %v599
    %617 = vst.msk [vmem:[%s5 + $0x20] sm:$0xff] %vm612, %v600
    %618 = vst.msk [vmem:[%s5 + $0x28] sm:$0xff] %vm612, %v601
    %619 = vst.msk [vmem:[%s5 + $0x30] sm:$0xff] %vm612, %v602
    %620 = vst.msk [vmem:[%s5 + $0x38] sm:$0xff] %vm612, %v603
    %621 = vst.msk [vmem:[%s5 + $0x40] sm:$0xff] %vm612, %v604
    %622 = vst.msk [vmem:[%s5 + $0x48] sm:$0xff] %vm612, %v605
    %623 = vst.msk [vmem:[%s5 + $0x50] sm:$0xff] %vm612, %v606
    %624 = vst.msk [vmem:[%s5 + $0x58] sm:$0xff] %vm612, %v607
    %625 = vst.msk [vmem:[%s5 + $0x60] sm:$0xff] %vm612, %v608
    %626 = vst.msk [vmem:[%s5 + $0x68] sm:$0xff] %vm612, %v609
    %627 = vst.msk [vmem:[%s5 + $0x70] sm:$0xff] %vm612, %v610
    %628 = vst.msk [vmem:[%s5 + $0x78] sm:$0xff] %vm612, %v611
    %v629 = vmul.f32 %v48, %v596
    %v630 = vmul.f32 %v49, %v597
    %v631 = vmul.f32 %v50, %v598
    %v632 = vmul.f32 %v51, %v599
    %v633 = vmul.f32 %v52, %v600
    %v634 = vmul.f32 %v53, %v601
    %v635 = vmul.f32 %v54, %v602
    %v636 = vmul.f32 %v55, %v603
    %v637 = vmul.f32 %v56, %v604
    %v638 = vmul.f32 %v57, %v605
    %v639 = vmul.f32 %v58, %v606
    %v640 = vmul.f32 %v59, %v607
    %v641 = vmul.f32 %v60, %v608
    %v642 = vmul.f32 %v61, %v609
    %v643 = vmul.f32 %v62, %v610
    %v644 = vmul.f32 %v63, %v611
    %645 = vst.msk [vmem:[#allocation7] sm:$0xff] %vm75, %v629
    %646 = vst.msk [vmem:[#allocation7 + $0x8] sm:$0xff] %vm75, %v630
    %647 = vst.msk [vmem:[#allocation7 + $0x10] sm:$0xff] %vm75, %v631
    %648 = vst.msk [vmem:[#allocation7 + $0x18] sm:$0xff] %vm75, %v632
    %649 = vst.msk [vmem:[#allocation7 + $0x20] sm:$0xff] %vm75, %v633
    %650 = vst.msk [vmem:[#allocation7 + $0x28] sm:$0xff] %vm75, %v634
    %651 = vst.msk [vmem:[#allocation7 + $0x30] sm:$0xff] %vm75, %v635
    %652 = vst.msk [vmem:[#allocation7 + $0x38] sm:$0xff] %vm75, %v636
    %653 = vst.msk [vmem:[#allocation7 + $0x40] sm:$0xff] %vm75, %v637
    %654 = vst.msk [vmem:[#allocation7 + $0x48] sm:$0xff] %vm75, %v638
    %655 = vst.msk [vmem:[#allocation7 + $0x50] sm:$0xff] %vm75, %v639
    %656 = vst.msk [vmem:[#allocation7 + $0x58] sm:$0xff] %vm75, %v640
    %657 = vst.msk [vmem:[#allocation7 + $0x60] sm:$0xff] %vm75, %v641
    %658 = vst.msk [vmem:[#allocation7 + $0x68] sm:$0xff] %vm75, %v642
    %659 = vst.msk [vmem:[#allocation7 + $0x70] sm:$0xff] %vm75, %v643
    %660 = vst.msk [vmem:[#allocation7 + $0x78] sm:$0xff] %vm75, %v644
    // Predicated region
    $region26: #{tpu_custom_call.1} parent=1 // pred_check
      _
    $region27: #{tpu_custom_call.1} parent=1 // pred_check_branch
      %662 = sbr.rel (0) target = $region29
    $region28: #{tpu_custom_call.1} parent=1 // pred_region
      %s664 = ssub.s32 2048, 2048
      %665 = vsyncadd [#allocation4], %s664
      %s666 = sshll.u32 [#allocation7], 4
      %s667 = int_to_ptr.vmem [resolvable:$true] %s666
      %672 = dma.vmem_to_hbm [thread:$0]  %s667, 2048, %s4, [#allocation4], 128, 128, 8
    $region29: #{tpu_custom_call.1} parent=1 // pred_fallthru
      _
    // Predicated region
    $region30: #{tpu_custom_call.1} parent=1 // pred_check
      _
    $region31: #{tpu_custom_call.1} parent=1 // pred_check_branch
      %674 = sbr.rel (0) target = $region33
    $region32: #{tpu_custom_call.1} parent=1 // pred_region
      _
    $region33: #{tpu_custom_call.1} parent=1 // pred_fallthru
      _
    // Predicated region
    $region34: #{tpu_custom_call.1} parent=1 // pred_check
      _
    $region35: #{tpu_custom_call.1} parent=1 // pred_check_branch
      %676 = sbr.rel (0) target = $region37
    $region36: #{tpu_custom_call.1} parent=1 // pred_region
      %677 = dma.done [#allocation4], 2048
    $region37: #{tpu_custom_call.1} parent=1 // pred_fallthru
      _
    // Predicated region
    $region38: #{tpu_custom_call.1} parent=1 // pred_check
      _
    $region39: #{tpu_custom_call.1} parent=1 // pred_check_branch
      %679 = sbr.rel (0) target = $region41
    $region40: #{tpu_custom_call.1} parent=1 // pred_region
      _
    $region41: #{tpu_custom_call.1} parent=1 // pred_fallthru
      _
    %680 = vsyncpa [#allocation3], 1
    %681 = vsyncpa [#allocation6], 1
    %682 = vsyncpa [#allocation4], 1

</llo_original>
